<compile_context>
chip_gen: v5e
topology: v5e:2x2
jax: 0.10.0
libtpu: 0.0.40
codegen_flags: <defaults>
</compile_context>

<pallas_src>
import functools
import math

import jax
import jax.numpy as jnp
from jax.experimental import pallas as pl
from jax.experimental.pallas import tpu as pltpu


_TILE_BUDGET_BYTES = 8 * 1024 * 1024    # target resident (double-buffered) bytes / step
_MIN_BLOCK_BYTES = 1 * 1024 * 1024      # soft floor for a single input block
_FUSED_MAX_ROW_BYTES = 256 * 1024       # fused path only while one (1, 2L) row <= this
_MAX_LANE_TILE = 4096                   # lane-tile cap for the column-split path
_TARGET_STEPS = 8                       # aim for >= 8 grid steps (pipelining + 2 TCs)


def _round_up(a, m):
    return ((a + m - 1) // m) * m


def _sublane_multiple(dtype):
    # Sub-32-bit dtypes pack along sublanes: f32 -> 8, bf16 -> 16, int8/fp8 -> 32.
    itemsize = jnp.dtype(dtype).itemsize
    return max(8, 8 * (4 // max(1, itemsize)))


def _vmem_limit_bytes():
    limit = 32 * 1024 * 1024    # > v5e's 16 MiB scoped default, << any chip's physical
    try:                        # never exceed half of physical VMEM (64 MiB/TC on v7x)
        limit = min(limit, int(pltpu.get_tpu_info().vmem_capacity_bytes) // 2)
    except Exception:
        pass
    return max(limit, 16 * 1024 * 1024)


def _cost(n_out, dtype):
    itemsize = jnp.dtype(dtype).itemsize
    return pl.CostEstimate(flops=2 * n_out, transcendentals=n_out,
                           bytes_accessed=3 * n_out * itemsize)


def _params(semantics):
    return pltpu.CompilerParams(dimension_semantics=semantics,
                                vmem_limit_bytes=_vmem_limit_bytes())


def _pick_row_tile(rows, row_resident_bytes, row_block_bytes, unit, budget):
    """Canonical rows per grid step: VMEM-capped, >= _TARGET_STEPS steps when possible,
    but never letting the per-step input block drop below ~_MIN_BLOCK_BYTES."""
    if rows <= unit:
        return rows
    cap = budget // row_resident_bytes
    cap = max(unit, (cap // unit) * unit) if cap >= unit else max(1, cap)
    tile = min(cap, _round_up(pl.cdiv(rows, _TARGET_STEPS), unit))
    floor = _round_up(pl.cdiv(_MIN_BLOCK_BYTES, max(1, row_block_bytes)), unit)
    tile = max(tile, min(floor, cap))
    return rows if tile >= rows else tile


# ---------------------------------------------------------------------------- kernels
def _glu_fused_kernel(x_ref, o_ref):
    """GLU on a single (tm, 2L) tile; L % 128 == 0 so the static slices are tile-aligned."""
    l = o_ref.shape[-1]
    o_ref[...] = (x_ref[:, :l] * jax.nn.sigmoid(x_ref[:, l:])).astype(o_ref.dtype)


def _glu_two_ref_kernel(lin_ref, gate_ref, o_ref):
    """GLU on two pre-split blocks that both start at lane offset 0."""
    o_ref[...] = (lin_ref[...] * jax.nn.sigmoid(gate_ref[...])).astype(o_ref.dtype)


# ------------------------------------------------------------------------------ paths
def _glu_fused_rows(x2d):
    """L % 128 == 0 and a (1, 2L) row is small: one contiguous (tm, 2L) block per step."""
    rows, two_l = x2d.shape
    l = two_l // 2
    itemsize = jnp.dtype(x2d.dtype).itemsize
    sub = _sublane_multiple(x2d.dtype)
    # Double-buffered resident bytes per canonical row: 2 * (2L input + L output).
    tm = _pick_row_tile(rows, 6 * l * itemsize, two_l * itemsize, sub, _TILE_BUDGET_BYTES)
    return pl.pallas_call(
        _glu_fused_kernel,
        out_shape=jax.ShapeDtypeStruct((rows, l), x2d.dtype),
        grid_spec=pltpu.PrefetchScalarGridSpec(
            num_scalar_prefetch=0,
            grid=(pl.cdiv(rows, tm),),
            in_specs=[pl.BlockSpec((tm, two_l), lambda i: (i, 0))],
            out_specs=pl.BlockSpec((tm, l), lambda i: (i, 0)),
        ),
        compiler_params=_params(("parallel",)),
        cost_estimate=_cost(rows * l, x2d.dtype),
    )(x2d)


def _glu_split_aligned(x2d):
    """L % 128 == 0 but a full row is too wide to fuse: column-tiled lane-dense half blocks."""
    rows, two_l = x2d.shape
    l = two_l // 2
    itemsize = jnp.dtype(x2d.dtype).itemsize
    sub = _sublane_multiple(x2d.dtype)

    # Lane tile: a multiple of 128 that divides L exactly (so the gate half starts at
    # block-column L/tc), capped so very wide rows still get several column steps.
    if l <= _MAX_LANE_TILE:
        tc = l
    else:
        tc = _MAX_LANE_TILE
        while l % tc != 0:
            tc -= 128
    n_col = l // tc

    tl = _pick_row_tile(rows, 6 * tc * itemsize, tc * itemsize, sub, _TILE_BUDGET_BYTES)
    return pl.pallas_call(
        _glu_two_ref_kernel,
        out_shape=jax.ShapeDtypeStruct((rows, l), x2d.dtype),
        grid_spec=pltpu.PrefetchScalarGridSpec(
            num_scalar_prefetch=0,
            grid=(pl.cdiv(rows, tl), n_col),
            in_specs=[pl.BlockSpec((tl, tc), lambda i, j: (i, j)),
                      pl.BlockSpec((tl, tc), lambda i, j: (i, j + n_col))],
            out_specs=pl.BlockSpec((tl, tc), lambda i, j: (i, j)),
        ),
        compiler_params=_params(("parallel", "parallel")),
        cost_estimate=_cost(rows * l, x2d.dtype),
    )(x2d, x2d)


def _glu_split_unaligned(x2d):
    """L % 128 != 0: (rows, 2, L) view, two (tl, 1, L) half blocks at lane offset 0."""
    rows, two_l = x2d.shape
    l = two_l // 2
    itemsize = jnp.dtype(x2d.dtype).itemsize
    x3d = x2d.reshape(rows, 2, l)

    # Conservative buffer estimate: assume the size-1 sublane dim of a (tl, 1, L) VMEM
    # buffer pads to a full 8-sublane tile and lanes round up to 128.
    row_res = 6 * 8 * _round_up(l, 128) * itemsize
    budget = _vmem_limit_bytes() // 2
    tl = _pick_row_tile(rows, row_res, l * itemsize, 1, budget)
    # TODO(synk): if L is simultaneously unaligned and enormous even tl=1 may overflow
    # VMEM; unreachable for realistic Squeezeformer shapes.
    return pl.pallas_call(
        _glu_two_ref_kernel,
        out_shape=jax.ShapeDtypeStruct((rows, 1, l), x2d.dtype),
        grid_spec=pltpu.PrefetchScalarGridSpec(
            num_scalar_prefetch=0,
            grid=(pl.cdiv(rows, tl),),
            in_specs=[pl.BlockSpec((tl, 1, l), lambda i: (i, 0, 0)),
                      pl.BlockSpec((tl, 1, l), lambda i: (i, 1, 0))],
            out_specs=pl.BlockSpec((tl, 1, l), lambda i: (i, 0, 0)),
        ),
        compiler_params=_params(("parallel",)),
        cost_estimate=_cost(rows * l, x2d.dtype),
    )(x3d, x3d)


# ---------------------------------------------------------------------------- wrapper
@functools.partial(jax.jit, static_argnames=("dim",))
def glu(x: jax.Array, dim: int = -1) -> jax.Array:
    """Gated linear unit: split x along `dim` into two halves, lin * sigmoid(gate)."""
    ndim = x.ndim
    dim = dim % ndim
    two_h = x.shape[dim]
    if two_h % 2 != 0:
        raise ValueError("split dimension must be even")
    h = two_h // 2
    out_shape = x.shape[:dim] + (h,) + x.shape[dim + 1:]

    rows = math.prod(x.shape[:dim])
    l = h * math.prod(x.shape[dim + 1:])
    itemsize = jnp.dtype(x.dtype).itemsize

    # Canonical (rows, 2L) view: contiguous -> free reshape; lin/gate are the first /
    # second L columns of each row regardless of which axis was split.
    x2d = x.reshape(rows, 2 * l)

    if l % 128 == 0 and 2 * l * itemsize <= _FUSED_MAX_ROW_BYTES:
        out2d = _glu_fused_rows(x2d)
    elif l % 128 == 0:
        out2d = _glu_split_aligned(x2d)
    else:
        out2d = _glu_split_unaligned(x2d).reshape(rows, l)
    return out2d.reshape(out_shape)


def _glu_ref(x: jax.Array, dim: int) -> jax.Array:
    x_lin, x_gate = jnp.split(x, 2, axis=dim)
    return x_lin * jax.nn.sigmoid(x_gate)


if __name__ == "__main__":
    key = jax.random.PRNGKey(0)
    k1, k2, k3, k4, k5 = jax.random.split(key, 5)

    # (a) last-axis split, H=128 (lane aligned)      -> fused contiguous-DMA path.
    x_a = jax.random.normal(k1, (2, 8, 256), dtype=jnp.float32)
    # (b) channels-first split on dim=1, (B, 2C, T)  -> canonical fold, fused path
    #     (L = C*T = 32*8 = 256 is lane aligned; no transpose, no h % 8 gate).
    x_b = jax.random.normal(k2, (2, 64, 8), dtype=jnp.float32)
    # (c) last-axis split, H=32 (lane unaligned)     -> (rows, 2, L) two-ref path.
    x_c = jax.random.normal(k3, (4, 6, 64), dtype=jnp.float32)
    # (d) dim=1 with odd sizes (h=5, trail=24)       -> unaligned path, L=120.
    x_d = jax.random.normal(k4, (2, 10, 24), dtype=jnp.float32)
    # (e) bf16, awkward row count (45 rows), H=128   -> ragged fused path, packed sublanes.
    x_e = jax.random.normal(k5, (5, 9, 256), dtype=jnp.bfloat16)

    y_a = jax.block_until_ready(glu(x_a, dim=-1))
    y_b = jax.block_until_ready(glu(x_b, dim=1))
    y_c = jax.block_until_ready(glu(x_c, dim=-1))
    y_d = jax.block_until_ready(glu(x_d, dim=1))
    y_e = jax.block_until_ready(glu(x_e, dim=-1))

    assert y_a.shape == (2, 8, 128)
    assert y_b.shape == (2, 32, 8)
    assert y_c.shape == (4, 6, 32)
    assert y_d.shape == (2, 5, 24)
    assert y_e.shape == (5, 9, 128)
    assert jnp.allclose(y_a, _glu_ref(x_a, -1), atol=1e-6, rtol=1e-6)
    assert jnp.allclose(y_b, _glu_ref(x_b, 1), atol=1e-6, rtol=1e-6)
    assert jnp.allclose(y_c, _glu_ref(x_c, -1), atol=1e-6, rtol=1e-6)
    assert jnp.allclose(y_d, _glu_ref(x_d, 1), atol=1e-6, rtol=1e-6)
    assert jnp.allclose(y_e.astype(jnp.float32), _glu_ref(x_e, -1).astype(jnp.float32),
                        atol=2e-2, rtol=2e-2)

    # Exercise the wide-row column-split path directly at a still-small size (L=8192
    # -> two 4096-lane column tiles, gate blocks at column offset L/tc).
    x_f = jax.random.normal(k2, (16, 2 * 8192), dtype=jnp.float32)
    y_f = jax.block_until_ready(_glu_split_aligned(x_f))
    assert y_f.shape == (16, 8192)
    assert jnp.allclose(y_f, _glu_ref(x_f, -1), atol=1e-6, rtol=1e-6)

    print("KERNEL_OK")
</pallas_src>

<mosaic_0001>
module attributes {stable_mosaic.version = 11 : i64} {
  func.func @_glu_fused_kernel(%arg0: i32, %arg1: memref<16x256xf32, #tpu.memory_space<vmem>>, %arg2: memref<16x128xf32, #tpu.memory_space<vmem>>) attributes {dimension_semantics = [#tpu.dimension_semantics<parallel>], iteration_bounds = array<i64: 1>, scalar_prefetch = 0 : i64, scratch_operands = 0 : i64, tpu.core_type = #tpu.core_type<tc>, window_params = [{transform_indices = @transform_0, window_bounds = array<i64: 16, 256>}, {transform_indices = @transform_1, window_bounds = array<i64: 16, 128>}]} {
    %c0 = arith.constant 0 : index
    %c0_0 = arith.constant 0 : index
    %0 = vector.load %arg1[%c0, %c0_0] : memref<16x256xf32, #tpu.memory_space<vmem>>, vector<16x128xf32>
    %c0_1 = arith.constant 0 : index
    %c128 = arith.constant 128 : index
    %1 = vector.load %arg1[%c0_1, %c128] : memref<16x256xf32, #tpu.memory_space<vmem>>, vector<16x128xf32>
    %2 = arith.negf %1 : vector<16x128xf32>
    %3 = math.exp %2 : vector<16x128xf32>
    %cst = arith.constant 1.000000e+00 : f32
    %4 = vector.broadcast %cst : f32 to vector<16x128xf32>
    %5 = arith.addf %4, %3 : vector<16x128xf32>
    %6 = arith.divf %4, %5 : vector<16x128xf32>
    %7 = arith.mulf %0, %6 : vector<16x128xf32>
    %c0_2 = arith.constant 0 : index
    %c0_3 = arith.constant 0 : index
    %8 = vector.load %arg2[%c0_2, %c0_3] : memref<16x128xf32, #tpu.memory_space<vmem>>, vector<16x128xf32>
    tpu.vector_store %arg2[%c0_2, %c0_3], %7 {strides = array<i32>} : memref<16x128xf32, #tpu.memory_space<vmem>>, vector<16x128xf32>,
    return
  }
  func.func @transform_0(%arg0: i32) -> (i32, i32) {
    %c0_i32 = arith.constant 0 : i32
    %c0_i32_0 = arith.constant 0 : i32
    return %arg0, %c0_i32 : i32, i32
  }
  func.func @transform_1(%arg0: i32) -> (i32, i32) {
    %c0_i32 = arith.constant 0 : i32
    %c0_i32_0 = arith.constant 0 : i32
    return %arg0, %c0_i32 : i32, i32
  }
}

</mosaic_0001>

<llo_original>
// kernel: glu.1
$region0: #{glu.1}
  #allocation0 [shape = 'u32[]', space=smem, size = 0x4, offset = 0x4, fixed_abs, tag = 'smem constant byte address 0x4 - core index']
  #allocation1 [shape = 'u32[72,128]{1,0:T(1,128)}', space=vmem, size = 0x9000, scoped, tag = 'internal scratch']
  %s0 = inlined_call_operand.hbm [shape: f32[16,256], index: 0, kind: input, shape index: {}]
  %s1 = inlined_call_operand.hbm [shape: f32[16,128], index: 1, kind: output, shape index: {}]
  %s2 = sld [smem:[#allocation0]]
  $region18: #{glu.1} parent=0
    _
  %s4 = ssub.s32 1, %s2
  %s5 = scalar_select 0, %s4, %s2
  $region1: #{glu.1} parent=0
    #allocation2 [shape = 'u8[16384]{0}', space=vmem, size = 0x4000, scoped, tag = 'input window, operand 0, single buffered']
    #allocation3 [shape = 's32[1]{0}', space=sflag, size = 0x4, scoped, tag = 'scoped memory for glu.1']
    #allocation4 [shape = 's32[1]{0}', space=sflag, size = 0x4, scoped, tag = 'scoped memory for glu.1']
    #allocation5 [shape = 'u8[8192]{0}', space=vmem, size = 0x2000, scoped, tag = 'output window, operand 0, single buffered']
    %6 = vsyncpa [#allocation3], 0
    %7 = vsyncpa [#allocation4], 0
    // Predicated region
    $region2: #{glu.1} parent=1 // pred_check
      _
    $region3: #{glu.1} parent=1 // pred_check_branch
      %9 = sbr.rel (0) target = $region5
    $region4: #{glu.1} parent=1 // pred_region
      %11 = vsyncadd [#allocation3], 0
      %s12 = sshll.u32 %s0, 4
      %s13 = int_to_ptr.hbm [resolvable:$true] %s12
      %s14 = sshll.u32 [#allocation2], 4
      %s15 = int_to_ptr.vmem [resolvable:$true] %s14
      %20 = dma.hbm_to_vmem [thread:$0]  %s13, 512, %s15, [#allocation3], 256, 256, 16
    $region5: #{glu.1} parent=1 // pred_fallthru
      _
    // Predicated region
    $region6: #{glu.1} parent=1 // pred_check
      _
    $region7: #{glu.1} parent=1 // pred_check_branch
      %22 = sbr.rel (0) target = $region9
    $region8: #{glu.1} parent=1 // pred_region
      %24 = dma.done [#allocation3], 512
    $region9: #{glu.1} parent=1 // pred_fallthru
      _
    %v25 = vld [vmem:[#allocation2] sm:$0xff]
    %v26 = vld [vmem:[#allocation2 + $0x10] sm:$0xff]
    %v27 = vld [vmem:[#allocation2 + $0x8] sm:$0xff]
    %v28 = vld [vmem:[#allocation2 + $0x18] sm:$0xff]
    %v29 = vxor.u32 %v27, 2147483648
    %v30 = vxor.u32 %v28, 2147483648
    %v31 = vmul.f32 %v29, 1.442695
    %v32 = vpow.pop %v31
    %v33 = vmul.f32 %v30, 1.442695
    %v34 = vpow.pop %v33
    %v35 = vadd.f32 %v32, 1.0
    %v36 = vadd.f32 %v34, 1.0
    %v37 = vrcp.pop %v35
    %v38 = vmul.f32 %v35, %v37
    %v39 = vsub.f32 1.0, %v38
    %v40 = vmul.f32 %v37, %v39
    %v41 = vadd.f32 %v37, %v40
    %vm42 = vweird.f32 %v35
    %vm43 = vweird.f32 %v37
    %vm44 = vmor %vm42, %vm43
    %v45 = vsel %vm44, %v37, %v41
    %v46 = vand.u32 2147483647, %v35
    %vm47 = vcmp.eq.f32.partialorder %v46, 8.507059e+37
    %v48 = vand.u32 %v35, 2147483648
    %v49 = vor.u32 1.1754944e-38, %v48
    %v50 = vsel %vm47, %v49, %v45
    %v51 = vmul.f32 1.0, %v50
    %v52 = vrcp.pop %v36
    %v53 = vmul.f32 %v36, %v52
    %v54 = vsub.f32 1.0, %v53
    %v55 = vmul.f32 %v52, %v54
    %v56 = vadd.f32 %v52, %v55
    %vm57 = vweird.f32 %v36
    %vm58 = vweird.f32 %v52
    %vm59 = vmor %vm57, %vm58
    %v60 = vsel %vm59, %v52, %v56
    %v61 = vand.u32 2147483647, %v36
    %vm62 = vcmp.eq.f32.partialorder %v61, 8.507059e+37
    %v63 = vand.u32 %v36, 2147483648
    %v64 = vor.u32 1.1754944e-38, %v63
    %v65 = vsel %vm62, %v64, %v60
    %v66 = vmul.f32 1.0, %v65
    %v67 = vmul.f32 %v25, %v51
    %v68 = vmul.f32 %v26, %v66
    %69 = vst [vmem:[#allocation5] sm:$0xff] %v67
    %70 = vst [vmem:[#allocation5 + $0x8] sm:$0xff] %v68
    // Predicated region
    $region10: #{glu.1} parent=1 // pred_check
      _
    $region11: #{glu.1} parent=1 // pred_check_branch
      %72 = sbr.rel (0) target = $region13
    $region12: #{glu.1} parent=1 // pred_region
      %74 = vsyncadd [#allocation4], 0
      %s75 = sshll.u32 [#allocation5], 4
      %s76 = int_to_ptr.vmem [resolvable:$true] %s75
      %s77 = sshll.u32 %s1, 4
      %s78 = int_to_ptr.hbm [resolvable:$true] %s77
      %83 = dma.vmem_to_hbm [thread:$0]  %s76, 256, %s78, [#allocation4], 128, 128, 8
    $region13: #{glu.1} parent=1 // pred_fallthru
      _
    // Predicated region
    $region14: #{glu.1} parent=1 // pred_check
      _
    $region15: #{glu.1} parent=1 // pred_check_branch
      %85 = sbr.rel (0) target = $region17
    $region16: #{glu.1} parent=1 // pred_region
      %87 = dma.done [#allocation4], 256
    $region17: #{glu.1} parent=1 // pred_fallthru
      _
    %88 = vsyncpa [#allocation3], 1
    %89 = vsyncpa [#allocation4], 1

</llo_original>
